<compile_context>
chip_gen: v7x
topology: tpu7x:2x2x1
jax: 0.10.0
libtpu: 0.0.40
codegen_flags: <defaults>
</compile_context>

<pallas_src>
import math
import functools

import jax
import jax.numpy as jnp
from jax.experimental import pallas as pl
from jax.experimental.pallas import tpu as pltpu


NEG_INF = -1e30  # large finite negative: no NaN rows if ever reused with padding masks


def _qkv_proj_kernel(x_ref, w_ref, o_ref):
    # x_ref: (1, TS, d_in); w_ref: (d_in, 3*d_out) -> o_ref: (1, TS, 3*d_out)
    o_ref[0] = jnp.dot(x_ref[0], w_ref[...],
                       preferred_element_type=jnp.float32).astype(o_ref.dtype)


def _flash_kernel(qi_ref, ki_ref, q_ref, k_ref, v_ref, wo_ref, bo_ref, o_ref,
                  m_sc, l_sc, acc_sc, *, scale):
    # qi_ref/ki_ref: SMEM int32 lookup tables (scalar prefetch), indexed by pair id.
    # q_ref: (1, H, TQ, hd)   k_ref/v_ref: (1, H, TK, hd)
    # wo_ref: (H, hd, d_out)  bo_ref: (1, d_out)   o_ref: (1, TQ, d_out)
    s_idx = pl.program_id(1)
    qi = qi_ref[s_idx]
    ki = ki_ref[s_idx]
    on_diag = ki == qi

    @pl.when(ki == 0)
    def _init():
        m_sc[...] = jnp.full_like(m_sc, -jnp.inf)
        l_sc[...] = jnp.zeros_like(l_sc)
        acc_sc[...] = jnp.zeros_like(acc_sc)

    # Fold 1/sqrt(hd) into Q (hd elems/row) instead of the (TQ, TK) score tile.
    q = q_ref[0] * scale                                         # (H, TQ, hd)
    k = k_ref[0]                                                 # (H, TK, hd)
    v = v_ref[0]                                                 # (H, TK, hd)

    # Batched QK^T over heads; contraction on head_dim — no materialized transpose.
    s = jax.lax.dot_general(
        q, k, (((2,), (2,)), ((0,), (0,))),
        preferred_element_type=jnp.float32)                      # (H, TQ, TK) f32

    # Only the diagonal tile needs the causal mask; strictly-past tiles (ki < qi) are
    # unmasked and strictly-future tiles never enter the grid at all.
    tq, tk = s.shape[1], s.shape[2]
    row = jax.lax.broadcasted_iota(jnp.int32, (tq, tk), 0)
    col = jax.lax.broadcasted_iota(jnp.int32, (tq, tk), 1)
    future = (col > row)[None] & on_diag
    s = jnp.where(future, NEG_INF, s)

    # Online-softmax (flash) update; stats stay f32.
    m_prev = m_sc[...]
    m_new = jnp.maximum(m_prev, jnp.max(s, axis=-1, keepdims=True))
    alpha = jnp.exp(m_prev - m_new)
    p = jnp.exp(s - m_new)                                       # (H, TQ, TK) f32
    l_sc[...] = alpha * l_sc[...] + jnp.sum(p, axis=-1, keepdims=True)
    pv = jax.lax.dot_general(
        p.astype(v.dtype), v, (((2,), (1,)), ((0,), (0,))),
        preferred_element_type=jnp.float32)                      # (H, TQ, hd) f32
    acc_sc[...] = alpha * acc_sc[...] + pv
    m_sc[...] = m_new

    # Epilogue on the last contributing kv tile (the diagonal one): normalize ONCE,
    # fuse the output projection + bias, write one lane-dense (TQ, d_out) slab.
    @pl.when(on_diag)
    def _epilogue():
        inv_l = pl.reciprocal(l_sc[...], approx=True)            # EUP slot, ~free
        ctx = (acc_sc[...] * inv_l).astype(wo_ref.dtype)         # (H, TQ, hd)
        # out = sum_h ctx_h @ Wo[h*hd:(h+1)*hd, :]  (batched matmul + head reduction,
        # avoids an in-kernel head-concat / relayout)
        out = jax.lax.dot_general(
            ctx, wo_ref[...], (((2,), (1,)), ((0,), (0,))),
            preferred_element_type=jnp.float32)                  # (H, TQ, d_out)
        out = jnp.sum(out, axis=0) + bo_ref[...].astype(jnp.float32)   # (TQ, d_out)
        o_ref[0] = out.astype(o_ref.dtype)


def _pick_seq_tile(T, target):
    """Largest multiple-of-8 divisor of T that is <= target (full T if T <= target)."""
    if T <= target:
        return T
    target = max(8, (target // 8) * 8)
    for t in range(target, 0, -8):
        if T % t == 0:
            return t
    return T  # TODO(synk): ragged T with no nice divisor falls back to a single tile.


def multi_head_attention(x, wq, wk, wv, wo, bo, *, num_heads, seq_tile=256):
    """x: (B, T, d_in); wq/wk/wv: (d_in, d_out); wo: (d_out, d_out); bo: (d_out,)."""
    B, T, d_in = x.shape
    d_out = wq.shape[1]
    assert d_out % num_heads == 0
    hd = d_out // num_heads
    tile = _pick_seq_tile(T, seq_tile)
    nt = T // tile

    # ---- 1) fused QKV projection ------------------------------------------------
    wqkv = jnp.concatenate([wq, wk, wv], axis=1)                 # (d_in, 3*d_out)
    qkv = pl.pallas_call(
        _qkv_proj_kernel,
        out_shape=jax.ShapeDtypeStruct((B, T, 3 * d_out), x.dtype),
        grid_spec=pltpu.PrefetchScalarGridSpec(
            num_scalar_prefetch=0,
            grid=(B, nt),
            in_specs=[
                pl.BlockSpec((1, tile, d_in), lambda b, s: (b, s, 0)),
                pl.BlockSpec((d_in, 3 * d_out), lambda b, s: (0, 0)),
            ],
            out_specs=pl.BlockSpec((1, tile, 3 * d_out), lambda b, s: (b, s, 0)),
        ),
        compiler_params=pltpu.CompilerParams(
            dimension_semantics=("parallel", "parallel"),
            vmem_limit_bytes=64 * 1024 * 1024),
    )(x, wqkv)

    # Head split in the wrapper = layout plumbing only: (B, H, T, hd).
    q, k, v = jnp.split(qkv, 3, axis=-1)

    def heads(t):
        return t.reshape(B, T, num_heads, hd).transpose(0, 2, 1, 3)

    q, k, v = heads(q), heads(k), heads(v)

    wo_h = wo.reshape(num_heads, hd, d_out)                      # per-head slice of out_proj
    bo2 = bo.reshape(1, d_out)

    # Lower-triangular (qi, ki) enumeration: fully-masked future kv tiles never get a
    # grid step or a DMA.  Tables live in SMEM (scalar prefetch) and drive index_maps.
    qi_list, ki_list = [], []
    for qi in range(nt):
        for ki in range(qi + 1):
            qi_list.append(qi)
            ki_list.append(ki)
    qi_map = jnp.asarray(qi_list, dtype=jnp.int32)
    ki_map = jnp.asarray(ki_list, dtype=jnp.int32)
    n_pairs = len(qi_list)

    kernel = functools.partial(_flash_kernel, scale=1.0 / math.sqrt(hd))

    # ---- 2) tiled causal flash attention with fused output projection -----------
    out = pl.pallas_call(
        kernel,
        out_shape=jax.ShapeDtypeStruct((B, T, d_out), x.dtype),
        grid_spec=pltpu.PrefetchScalarGridSpec(
            num_scalar_prefetch=2,
            grid=(B, n_pairs),                                   # pair axis is the reduction
            in_specs=[
                pl.BlockSpec((1, num_heads, tile, hd),
                             lambda b, s, qm, km: (b, 0, qm[s], 0)),
                pl.BlockSpec((1, num_heads, tile, hd),
                             lambda b, s, qm, km: (b, 0, km[s], 0)),
                pl.BlockSpec((1, num_heads, tile, hd),
                             lambda b, s, qm, km: (b, 0, km[s], 0)),
                pl.BlockSpec((num_heads, hd, d_out),
                             lambda b, s, qm, km: (0, 0, 0)),
                pl.BlockSpec((1, d_out), lambda b, s, qm, km: (0, 0)),
            ],
            out_specs=pl.BlockSpec((1, tile, d_out),
                                   lambda b, s, qm, km: (b, qm[s], 0)),
            scratch_shapes=[
                pltpu.VMEM((num_heads, tile, 1), jnp.float32),   # m  (running max)
                pltpu.VMEM((num_heads, tile, 1), jnp.float32),   # l  (running denom)
                pltpu.VMEM((num_heads, tile, hd), jnp.float32),  # acc (unnormalized ctx)
            ],
        ),
        compiler_params=pltpu.CompilerParams(
            # Batch axis parallel (keeps both v7x TensorCores busy); the flattened
            # (qi, ki) pair axis carries the running softmax state -> arbitrary.
            dimension_semantics=("parallel", "arbitrary"),
            vmem_limit_bytes=64 * 1024 * 1024),                  # fits v7x 64 MiB budget
    )(qi_map, ki_map, q, k, v, wo_h, bo2)
    return out


def reference_mha(x, wq, wk, wv, wo, bo, *, num_heads):
    """Pure-JAX reference mirroring the PyTorch forward (eval mode)."""
    B, T, d_in = x.shape
    d_out = wq.shape[1]
    hd = d_out // num_heads
    q = (x @ wq).reshape(B, T, num_heads, hd).transpose(0, 2, 1, 3)
    k = (x @ wk).reshape(B, T, num_heads, hd).transpose(0, 2, 1, 3)
    v = (x @ wv).reshape(B, T, num_heads, hd).transpose(0, 2, 1, 3)
    s = jnp.einsum("bhqd,bhkd->bhqk", q, k) / math.sqrt(hd)
    mask = jnp.triu(jnp.ones((T, T), dtype=bool), k=1)
    s = jnp.where(mask[None, None], -jnp.inf, s)
    w = jax.nn.softmax(s, axis=-1)
    ctx = jnp.einsum("bhqk,bhkd->bhqd", w, v).transpose(0, 2, 1, 3).reshape(B, T, d_out)
    return ctx @ wo + bo


# TODO(synk): nn.Dropout on attention weights is identity in eval mode / p=0; not applied.

if __name__ == "__main__":
    # --- Small shapes consistent with the module: batch=2, seq=8, d_in=32, heads=4 ---
    B, T, d_in, d_out, num_heads = 2, 8, 32, 32, 4
    key = jax.random.PRNGKey(0)
    kx, kq, kk, kv, ko, kb = jax.random.split(key, 6)

    x = jax.random.normal(kx, (B, T, d_in), dtype=jnp.float32)
    bnd_q = 1.0 / math.sqrt(d_in)
    bnd_o = 1.0 / math.sqrt(d_out)
    wq = jax.random.uniform(kq, (d_in, d_out), jnp.float32, -bnd_q, bnd_q)
    wk = jax.random.uniform(kk, (d_in, d_out), jnp.float32, -bnd_q, bnd_q)
    wv = jax.random.uniform(kv, (d_in, d_out), jnp.float32, -bnd_q, bnd_q)
    wo = jax.random.uniform(ko, (d_out, d_out), jnp.float32, -bnd_o, bnd_o)
    bo = jax.random.uniform(kb, (d_out,), jnp.float32, -bnd_o, bnd_o)

    out = jax.block_until_ready(
        multi_head_attention(x, wq, wk, wv, wo, bo, num_heads=num_heads))
    ref = reference_mha(x, wq, wk, wv, wo, bo, num_heads=num_heads)
    assert out.shape == (B, T, d_out)
    # Tolerance covers MXU precision-mode differences between Pallas matmuls and the
    # XLA reference; structural bugs would show up as O(0.1-1) errors.
    assert jnp.allclose(out, ref, atol=2e-2, rtol=2e-2)

    # --- Multi-tile path: exercises online softmax, diagonal masking, triangular grid ---
    B2, T2, din2, dout2, H2 = 2, 256, 64, 128, 4
    k2 = jax.random.split(jax.random.PRNGKey(0), 6)
    b2q, b2o = 1.0 / math.sqrt(din2), 1.0 / math.sqrt(dout2)
    x2 = jax.random.normal(k2[0], (B2, T2, din2), dtype=jnp.float32)
    wq2 = jax.random.uniform(k2[1], (din2, dout2), jnp.float32, -b2q, b2q)
    wk2 = jax.random.uniform(k2[2], (din2, dout2), jnp.float32, -b2q, b2q)
    wv2 = jax.random.uniform(k2[3], (din2, dout2), jnp.float32, -b2q, b2q)
    wo2 = jax.random.uniform(k2[4], (dout2, dout2), jnp.float32, -b2o, b2o)
    bo2 = jax.random.uniform(k2[5], (dout2,), jnp.float32, -b2o, b2o)
    out2 = jax.block_until_ready(multi_head_attention(
        x2, wq2, wk2, wv2, wo2, bo2, num_heads=H2, seq_tile=128))
    ref2 = reference_mha(x2, wq2, wk2, wv2, wo2, bo2, num_heads=H2)
    assert jnp.allclose(out2, ref2, atol=2e-2, rtol=2e-2)

    # --- bf16 MXU-operand path (v6e/v7x peak): bf16 inputs/weights, f32 accumulation ---
    bf = jnp.bfloat16
    out_bf = jax.block_until_ready(multi_head_attention(
        x2.astype(bf), wq2.astype(bf), wk2.astype(bf), wv2.astype(bf),
        wo2.astype(bf), bo2.astype(bf), num_heads=H2, seq_tile=128))
    assert jnp.allclose(out_bf.astype(jnp.float32), ref2, atol=1e-1, rtol=1e-1)

    print("KERNEL_OK")
</pallas_src>

<mosaic_0001>
module attributes {stable_mosaic.version = 11 : i64} {
  func.func @_qkv_proj_kernel(%arg0: i32, %arg1: i32, %arg2: memref<1x8x32xf32, #tpu.memory_space<vmem>>, %arg3: memref<32x96xf32, #tpu.memory_space<vmem>>, %arg4: memref<1x8x96xf32, #tpu.memory_space<vmem>>) attributes {dimension_semantics = [#tpu.dimension_semantics<parallel>, #tpu.dimension_semantics<parallel>], iteration_bounds = array<i64: 2, 1>, scalar_prefetch = 0 : i64, scratch_operands = 0 : i64, tpu.core_type = #tpu.core_type<tc>, window_params = [{transform_indices = @transform_0, window_bounds = array<i64: 1, 8, 32>}, {pipeline_mode = #tpu.pipeline_mode<synchronous>, transform_indices = @transform_1, window_bounds = array<i64: 32, 96>}, {transform_indices = @transform_2, window_bounds = array<i64: 1, 8, 96>}]} {
    %c0 = arith.constant 0 : index
    %c0_0 = arith.constant 0 : index
    %c0_1 = arith.constant 0 : index
    %0 = vector.load %arg2[%c0, %c0_0, %c0_1] : memref<1x8x32xf32, #tpu.memory_space<vmem>>, vector<1x8x32xf32>
    %1 = vector.shape_cast %0 : vector<1x8x32xf32> to vector<8x32xf32>
    %c0_2 = arith.constant 0 : index
    %c0_3 = arith.constant 0 : index
    %2 = vector.load %arg3[%c0_2, %c0_3] : memref<32x96xf32, #tpu.memory_space<vmem>>, vector<32x96xf32>
    %cst = arith.constant dense<0.000000e+00> : vector<8x96xf32>
    %3 = tpu.matmul %1, %2, %cst {dimension_numbers = #tpu.dot_dimension_numbers<[1], [0], [0], [1], [0, 0, 1, 1], [], []>} : vector<8x32xf32>, vector<32x96xf32>, vector<8x96xf32> -> vector<8x96xf32>
    %c0_4 = arith.constant 0 : index
    %c0_5 = arith.constant 0 : index
    %c0_6 = arith.constant 0 : index
    %4 = vector.load %arg4[%c0_4, %c0_5, %c0_6] : memref<1x8x96xf32, #tpu.memory_space<vmem>>, vector<1x8x96xf32>
    %5 = vector.shape_cast %4 : vector<1x8x96xf32> to vector<8x96xf32>
    %6 = vector.shape_cast %3 : vector<8x96xf32> to vector<1x8x96xf32>
    tpu.vector_store %arg4[%c0_4, %c0_5, %c0_6], %6 {strides = array<i32>} : memref<1x8x96xf32, #tpu.memory_space<vmem>>, vector<1x8x96xf32>,
    return
  }
  func.func @transform_0(%arg0: i32, %arg1: i32) -> (i32, i32, i32) {
    %c0_i32 = arith.constant 0 : i32
    %c0_i32_0 = arith.constant 0 : i32
    return %arg0, %arg1, %c0_i32 : i32, i32, i32
  }
  func.func @transform_1(%arg0: i32, %arg1: i32) -> (i32, i32) {
    %c0_i32 = arith.constant 0 : i32
    %c0_i32_0 = arith.constant 0 : i32
    %c0_i32_1 = arith.constant 0 : i32
    return %c0_i32, %c0_i32_0 : i32, i32
  }
  func.func @transform_2(%arg0: i32, %arg1: i32) -> (i32, i32, i32) {
    %c0_i32 = arith.constant 0 : i32
    %c0_i32_0 = arith.constant 0 : i32
    return %arg0, %arg1, %c0_i32 : i32, i32, i32
  }
}

</mosaic_0001>

<llo_original>
// kernel: tpu_custom_call.1
$region0: #{tpu_custom_call.1}
  #allocation0 [shape = 'u32[]', space=smem, size = 0x4, offset = 0x4, fixed_abs, tag = 'smem constant byte address 0x4 - core index']
  #allocation1 [shape = 'u32[144,128]{1,0:T(1,128)}', space=vmem, size = 0x12000, scoped, tag = 'internal scratch']
  %s0 = inlined_call_operand.hbm [shape: f32[2,8,32], index: 0, kind: input, shape index: {}]
  %s1 = inlined_call_operand.hbm [shape: f32[32,96], index: 1, kind: input, shape index: {}]
  %s2 = inlined_call_operand.hbm [shape: f32[2,8,96], index: 2, kind: output, shape index: {}]
  %s3 = sld [smem:[#allocation0]]
  $region49: #{tpu_custom_call.1} parent=0
    _
  %s5 = ssub.s32 1, %s3
  %s6 = scalar_select 0, %s5, %s3
  $region1: #{tpu_custom_call.1} parent=0
    #allocation2 [shape = 'u8[8192]{0}', space=vmem, size = 0x2000, scoped, tag = 'input window, operand 0']
    #allocation3 [shape = 's32[2]{0}', space=sflag, size = 0x8, scoped, tag = 'scoped memory for tpu_custom_call.1']
    #allocation4 [shape = 's32[2]{0}', space=sflag, size = 0x8, scoped, tag = 'scoped memory for tpu_custom_call.1']
    #allocation5 [shape = 'u8[16384]{0}', space=vmem, size = 0x4000, scoped, tag = 'input window, operand 1, single buffered']
    #allocation6 [shape = 's32[1]{0}', space=sflag, size = 0x4, scoped, tag = 'scoped memory for tpu_custom_call.1']
    #allocation7 [shape = 'u8[8192]{0}', space=vmem, size = 0x2000, scoped, tag = 'output window, operand 0']
    %7 = vsyncpa [#allocation3], 0
    %s8 = scalar_lea.sflag [#allocation3], 1
    %9 = vsyncpa %s8, 0
    %10 = vsyncpa [#allocation6], 0
    %11 = vsyncpa [#allocation4], 0
    %s12 = scalar_lea.sflag [#allocation4], 1
    %13 = vsyncpa %s12, 0
    loop: start=0, step=1, limit=4
    $region2: #{tpu_custom_call.1} parent=1 // loop_pre_header
      _
    $region3: #{tpu_custom_call.1} parent=1 // loop_header
      %s15 = sphi 0, %s19
      %p16 = scmp.ge.s32.totalorder %s15, 4
      %s22 = sphi 0, %s34
      %s23 = sphi 0, %s30
      %s24 = sphi 0, %s22
      %s25 = sphi 0, %s23
      %s26 = sphi 0, %s24
      %s27 = sphi 0, %s25
      %s39 = sphi 0, %s41
      %s42 = sphi 0, %s39
      %s43 = sphi 0, %s42
      %s59 = sphi 0, %s43
      %s63 = sphi 0, %s63
      %s65 = sphi 0, %s63
      %s66 = sphi 0, %s65
      %s80 = sphi 0, %s66
      %s88 = sphi 0, %s90
      %s91 = sphi 0, %s88
      %s92 = sphi 0, %s91
      %s108 = sphi 0, %s92
    $region4: #{tpu_custom_call.1} parent=1 // loop_header_branch
      %18 = sbr.rel (%p16) target = $region8
    $region5: #{tpu_custom_call.1} parent=1 // loop_body
      %s20 = ssub.s32 %s15, 1
      %s21 = ssub.s32 %s15, 2
      %s28 = sadd.s32 1, %s23
      %p29 = scmp.ge.s32.totalorder %s28, 1
      %s30 = scalar_select %p29, 0, %s28
      %s31 = sadd.s32 1, %s22
      %s32 = scalar_select %p29, %s31, %s22
      %p33 = scmp.ge.s32.totalorder %s32, 2
      %s34 = scalar_select %p33, 0, %s32
      %s35 = ssub.s32 %s22, %s34
      %s36 = ssub.s32 %s23, %s30
      %s37 = sor.u32 %s35, %s36
      %p38 = scmp.eq.s32.totalorder %s37, 0
      %s40 = sadd.s32 %s39, 1
      %s41 = scalar_select %p38, %s39, %s40
      %p44 = pneg %p38
      %p45 = scmp.eq.s32.totalorder %s15, 1
      %p46 = por %p44, %p45
      %p47 = scmp.ne.s32.totalorder %s39, %s42
      %p48 = scmp.eq.s32.totalorder %s15, 0
      %p49 = por %p47, %p48
      %p50 = scmp.ne.s32.totalorder %s39, %s42
      %p51 = scmp.eq.s32.totalorder %s20, 1
      %p52 = por %p50, %p51
      %p53 = scmp.ne.s32.totalorder %s42, %s43
      %p54 = scmp.eq.s32.totalorder %s20, 0
      %p55 = por %p53, %p54
      %p56 = scmp.ne.s32.totalorder %s42, %s43
      %p57 = scmp.eq.s32.totalorder %s21, 1
      %p58 = por %p56, %p57
      %p60 = scmp.ne.s32.totalorder %s43, %s59
      %p61 = scmp.eq.s32.totalorder %s21, 0
      %p62 = por %p60, %p61
      %s64 = sadd.s32 %s63, 1
      %p67 = scmp.eq.s32.totalorder %s15, 1
      %p68 = scmp.ne.s32.totalorder %s63, %s65
      %p69 = scmp.eq.s32.totalorder %s15, 0
      %p70 = por %p68, %p69
      %p71 = scmp.ne.s32.totalorder %s63, %s65
      %p72 = scmp.eq.s32.totalorder %s20, 1
      %p73 = por %p71, %p72
      %p74 = scmp.ne.s32.totalorder %s65, %s66
      %p75 = scmp.eq.s32.totalorder %s20, 0
      %p76 = por %p74, %p75
      %p77 = scmp.ne.s32.totalorder %s65, %s66
      %p78 = scmp.eq.s32.totalorder %s21, 1
      %p79 = por %p77, %p78
      %p81 = scmp.ne.s32.totalorder %s66, %s80
      %p82 = scmp.eq.s32.totalorder %s21, 0
      %p83 = por %p81, %p82
      %s84 = ssub.s32 %s22, %s34
      %s85 = ssub.s32 %s23, %s30
      %s86 = sor.u32 %s84, %s85
      %p87 = scmp.eq.s32.totalorder %s86, 0
      %s89 = sadd.s32 %s88, 1
      %s90 = scalar_select %p87, %s88, %s89
      %p93 = pneg %p87
      %p94 = scmp.eq.s32.totalorder %s15, 1
      %p95 = por %p93, %p94
      %p96 = scmp.ne.s32.totalorder %s88, %s91
      %p97 = scmp.eq.s32.totalorder %s15, 0
      %p98 = por %p96, %p97
      %p99 = scmp.ne.s32.totalorder %s88, %s91
      %p100 = scmp.eq.s32.totalorder %s20, 1
      %p101 = por %p99, %p100
      %p102 = scmp.ne.s32.totalorder %s91, %s92
      %p103 = scmp.eq.s32.totalorder %s20, 0
      %p104 = por %p102, %p103
      %p105 = scmp.ne.s32.totalorder %s91, %s92
      %p106 = scmp.eq.s32.totalorder %s21, 1
      %p107 = por %p105, %p106
      %p109 = scmp.ne.s32.totalorder %s92, %s108
      %p110 = scmp.eq.s32.totalorder %s21, 0
      %p111 = por %p109, %p110
      %p112 = scmp.le.s32.totalorder 1, %s15
      %p113 = scmp.lt.s32.totalorder %s15, 3
      %p114 = pnand %p112, %p113
      %p115 = pneg %p114
      // Predicated region
      $region9: #{tpu_custom_call.1} parent=5 // pred_check
        _
      $region10: #{tpu_custom_call.1} parent=5 // pred_check_branch
        %117 = sbr.rel (%p114) target = $region12
      $region11: #{tpu_custom_call.1} parent=5 // pred_region
        %s118 = ssub.s32 %s15, 1
        // Predicated region
        $region13: #{tpu_custom_call.1} parent=11 // pred_check
          %p119 = pneg %p76
        $region14: #{tpu_custom_call.1} parent=11 // pred_check_branch
          %121 = sbr.rel (%p119) target = $region16
        $region15: #{tpu_custom_call.1} parent=11 // pred_region
          %s123 = ssub.s32 512, 512
          %124 = vsyncadd [#allocation6], %s123
          %s125 = sshll.u32 [#allocation5], 4
          %s126 = int_to_ptr.vmem [resolvable:$true] %s125
          %131 = dma.hbm_to_vmem [thread:$0]  %s1, 512, %s126, [#allocation6], 128, 128, 8
        $region16: #{tpu_custom_call.1} parent=11 // pred_fallthru
          _
      $region12: #{tpu_custom_call.1} parent=5 // pred_fallthru
        _
      %p132 = scmp.lt.s32.totalorder %s15, 2
      // Predicated region
      $region17: #{tpu_custom_call.1} parent=5 // pred_check
        %p133 = pneg %p132
      $region18: #{tpu_custom_call.1} parent=5 // pred_check_branch
        %135 = sbr.rel (%p133) target = $region20
      $region19: #{tpu_custom_call.1} parent=5 // pred_region
        // Predicated region
        $region21: #{tpu_custom_call.1} parent=19 // pred_check
          %p136 = pneg %p49
        $region22: #{tpu_custom_call.1} parent=19 // pred_check_branch
          %138 = sbr.rel (%p136) target = $region24
        $region23: #{tpu_custom_call.1} parent=19 // pred_region
          %s139 = sand.u32 %s39, 1
          %s140 = scalar_lea.sflag [#allocation3], %s139
          %s141 = sand.u32 %s39, 1
          %s142 = smul.addr %s141, 8
          %s143 = scalar_lea.vmem [#allocation2], %s142
          %s145 = ssub.s32 128, 128
          %146 = vsyncadd %s140, %s145
          %s147 = sadd.s32 %s23, %s22
          %s148 = smul.addr %s147, 128
          %s149 = scalar_lea.hbm %s0, %s148
          %s151 = sshll.u32 %s143, 4
          %s152 = int_to_ptr.vmem [resolvable:$true] %s151
          %154 = dma.hbm_to_vmem [thread:$0]  %s149, 128, %s152, %s140
        $region24: #{tpu_custom_call.1} parent=19 // pred_fallthru
          _
      $region20: #{tpu_custom_call.1} parent=5 // pred_fallthru
        _
      %p155 = scmp.le.s32.totalorder 1, %s15
      %p156 = scmp.lt.s32.totalorder %s15, 3
      %p157 = pnand %p155, %p156
      %p158 = pneg %p157
      // Predicated region
      $region25: #{tpu_custom_call.1} parent=5 // pred_check
        _
      $region26: #{tpu_custom_call.1} parent=5 // pred_check_branch
        %160 = sbr.rel (%p157) target = $region28
      $region27: #{tpu_custom_call.1} parent=5 // pred_region
        %s161 = ssub.s32 %s15, 1
        %s162 = sand.u32 %s42, 1
        %s163 = scalar_lea.sflag [#allocation3], %s162
        %s164 = sand.u32 %s42, 1
        %s165 = smul.addr %s164, 8
        %s166 = scalar_lea.vmem [#allocation2], %s165
        // Predicated region
        $region29: #{tpu_custom_call.1} parent=27 // pred_check
          %p167 = pneg %p55
        $region30: #{tpu_custom_call.1} parent=27 // pred_check_branch
          %169 = sbr.rel (%p167) target = $region32
        $region31: #{tpu_custom_call.1} parent=27 // pred_region
          %170 = dma.done %s163, 128
        $region32: #{tpu_custom_call.1} parent=27 // pred_fallthru
          _
        // Predicated region
        $region33: #{tpu_custom_call.1} parent=27 // pred_check
          %p171 = pneg %p76
        $region34: #{tpu_custom_call.1} parent=27 // pred_check_branch
          %173 = sbr.rel (%p171) target = $region36
        $region35: #{tpu_custom_call.1} parent=27 // pred_region
          %174 = dma.done [#allocation6], 512
        $region36: #{tpu_custom_call.1} parent=27 // pred_fallthru
          _
        %s175 = sand.u32 %s42, 1
        %s176 = scalar_lea.sflag [#allocation3], %s175
        %s177 = sand.u32 %s42, 1
        %s178 = smul.addr %s177, 8
        %s179 = scalar_lea.vmem [#allocation2], %s178
        %p180 = pneg %p55
        %p181 = pneg %p52
        %p182 = pneg %p76
        %p183 = pneg %p73
        %p184 = pneg %p104
        %p185 = pneg %p101
        %s186 = sand.u32 %s91, 1
        %s187 = scalar_lea.sflag [#allocation4], %s186
        %s188 = sand.u32 %s91, 1
        %s189 = smul.addr %s188, 8
        %s190 = scalar_lea.vmem [#allocation7], %s189
        %v191 = vld [vmem:[%s166] sm:$0xff]
        %v192 = vld [vmem:[#allocation5] sm:$0xff]
        %v193 = vld [vmem:[#allocation5 + $0x8] sm:$0xff]
        %v194 = vld [vmem:[#allocation5 + $0x10] sm:$0xff]
        %v195 = vld [vmem:[#allocation5 + $0x18] sm:$0xff]
        %vm196 = vcmask 261120
        %v198 = vsel %vm196, %v191, 0
        %200 = vmatprep.subr.mxu0 0.0
        %201 = vmatpush1.msra.mxu0 %v192
        %202 = vmatprep.subr.mxu0 0.0
        %203 = vmatpush1.msra.mxu0 %v193
        %204 = vmatprep.subr.mxu0 0.0
        %205 = vmatpush1.msra.mxu0 %v194
        %206 = vmatprep.subr.mxu0 0.0
        %207 = vmatpush1.msra.mxu0 %v195
        %208 = vmatprep.subr.mxu0 0.0
        %209 = vmatpush1.msra.mxu0 0.0
        %210 = vmatprep.subr.mxu0 0.0
        %211 = vmatpush1.msra.mxu0 0.0
        %212 = vmatprep.subr.mxu0 0.0
        %213 = vmatpush1.msra.mxu0 0.0
        %214 = vmatprep.subr.mxu0 0.0
        %215 = vmatpush1.msra.mxu0 0.0
        %216 = vmatprep.subr.mxu0 0.0
        %217 = vmatpush1.msra.mxu0 0.0
        %218 = vmatprep.subr.mxu0 0.0
        %219 = vmatpush1.msra.mxu0 0.0
        %220 = vmatprep.subr.mxu0 0.0
        %221 = vmatpush1.msra.mxu0 0.0
        %222 = vmatprep.subr.mxu0 0.0
        %223 = vmatpush1.msra.mxu0 0.0
        %224 = vmatprep.subr.mxu0 0.0
        %225 = vmatpush1.msra.mxu0 0.0
        %226 = vmatprep.subr.mxu0 0.0
        %227 = vmatpush1.msra.mxu0 0.0
        %228 = vmatprep.subr.mxu0 0.0
        %229 = vmatpush1.msra.mxu0 0.0
        %230 = vmatprep.subr.mxu0 0.0
        %231 = vmatpush1.msra.mxu0 0.0
        %232 = vmatprep.subr.mxu0 0.0
        %233 = vmatpush1.msra.mxu0 0.0
        %234 = vmatprep.subr.mxu0 0.0
        %235 = vmatpush1.msra.mxu0 0.0
        %236 = vmatprep.subr.mxu0 0.0
        %237 = vmatpush1.msra.mxu0 0.0
        %238 = vmatprep.subr.mxu0 0.0
        %239 = vmatpush1.msra.mxu0 0.0
        %240 = vmatprep.subr.mxu0 0.0
        %241 = vmatpush1.msra.mxu0 0.0
        %242 = vmatprep.subr.mxu0 0.0
        %243 = vmatpush1.msra.mxu0 0.0
        %244 = vmatprep.subr.mxu0 0.0
        %245 = vmatpush1.msra.mxu0 0.0
        %246 = vmatprep.subr.mxu0 0.0
        %247 = vmatpush1.msra.mxu0 0.0
        %248 = vmatprep.subr.mxu0 0.0
        %249 = vmatpush1.msra.mxu0 0.0
        %250 = vmatprep.subr.mxu0 0.0
        %251 = vmatpush1.msra.mxu0 0.0
        %252 = vmatprep.subr.mxu0 0.0
        %253 = vmatpush1.msra.mxu0 0.0
        %254 = vmatprep.subr.mxu0 0.0
        %255 = vmatpush1.msra.mxu0 0.0
        %256 = vmatprep.subr.mxu0 0.0
        %257 = vmatpush1.msra.mxu0 0.0
        %258 = vmatprep.subr.mxu0 0.0
        %259 = vmatpush1.msra.mxu0 0.0
        %260 = vmatprep.subr.mxu0 0.0
        %261 = vmatpush1.msra.mxu0 0.0
        %262 = vmatprep.subr.mxu0 0.0
        %263 = vmatpush1.msra.mxu0 0.0
        %264 = vmatprep.mubr.f32.mxu0 0.0
        %265 = vmatmul.mubr.f32.gmra.mrb[0].mxu0 %v198
        %v266 = vpop.f32.mrb[0].mxu0
        %v267 = vadd.f32 0.0, %v266
        %v268 = vpop.f32.mrb[0].mxu0
        %269 = vdwg.mxu0
        %vm270 = vcmask 785408
        %271 = vst.msk [vmem:[%s190] sm:$0xff] %vm270, %v267
        %s272 = sand.u32 %s91, 1
        %s273 = scalar_lea.sflag [#allocation4], %s272
        %s274 = sand.u32 %s91, 1
        %s275 = smul.addr %s274, 8
        %s276 = scalar_lea.vmem [#allocation7], %s275
        // Predicated region
        $region37: #{tpu_custom_call.1} parent=27 // pred_check
          %p277 = pneg %p101
        $region38: #{tpu_custom_call.1} parent=27 // pred_check_branch
          %279 = sbr.rel (%p277) target = $region40
        $region39: #{tpu_custom_call.1} parent=27 // pred_region
          %s281 = ssub.s32 128, 128
          %282 = vsyncadd %s273, %s281
          %s283 = sadd.s32 %s25, %s24
          %s284 = smul.addr %s283, 128
          %s285 = scalar_lea.hbm %s2, %s284
          %s287 = sshll.u32 %s276, 4
          %s288 = int_to_ptr.vmem [resolvable:$true] %s287
          %290 = dma.vmem_to_hbm [thread:$0]  %s288, 128, %s285, %s273
        $region40: #{tpu_custom_call.1} parent=27 // pred_fallthru
          _
      $region28: #{tpu_custom_call.1} parent=5 // pred_fallthru
        _
      %p291 = scmp.le.s32.totalorder 2, %s15
      // Predicated region
      $region41: #{tpu_custom_call.1} parent=5 // pred_check
        %p292 = pneg %p291
      $region42: #{tpu_custom_call.1} parent=5 // pred_check_branch
        %294 = sbr.rel (%p292) target = $region44
      $region43: #{tpu_custom_call.1} parent=5 // pred_region
        %s295 = ssub.s32 %s15, 2
        // Predicated region
        $region45: #{tpu_custom_call.1} parent=43 // pred_check
          %p296 = pneg %p107
        $region46: #{tpu_custom_call.1} parent=43 // pred_check_branch
          %298 = sbr.rel (%p296) target = $region48
        $region47: #{tpu_custom_call.1} parent=43 // pred_region
          %s299 = sand.u32 %s92, 1
          %s300 = scalar_lea.sflag [#allocation4], %s299
          %s301 = sand.u32 %s92, 1
          %s302 = smul.addr %s301, 8
          %s303 = scalar_lea.vmem [#allocation7], %s302
          %304 = dma.done %s300, 128
        $region48: #{tpu_custom_call.1} parent=43 // pred_fallthru
          _
      $region44: #{tpu_custom_call.1} parent=5 // pred_fallthru
        _
    $region6: #{tpu_custom_call.1} parent=1 // loop_footer
      %s19 = sadd.s32 1, %s15
    $region7: #{tpu_custom_call.1} parent=1 // loop_footer_branch
      %14 = sbr.rel target = $region3
    $region8: #{tpu_custom_call.1} parent=1 // loop_exit
      _
    %305 = vsyncpa [#allocation3], 1
    %s306 = scalar_lea.sflag [#allocation3], 1
    %307 = vsyncpa %s306, 1
    %308 = vsyncpa [#allocation6], 1
    %309 = vsyncpa [#allocation4], 1
    %s310 = scalar_lea.sflag [#allocation4], 1
    %311 = vsyncpa %s310, 1

</llo_original>
